<compile_context>
chip_gen: v6e
topology: v6e:2x2x1
jax: 0.10.0
libtpu: 0.0.40
codegen_flags: <defaults>
</compile_context>

<pallas_src>
import jax
import jax.numpy as jnp
from jax.experimental import pallas as pl
from jax.experimental.pallas import tpu as pltpu

# --- module "parameters" (from CauchyNLL.__init__ defaults) -------------------
SCALE_INIT = 0.5413          # scale_init
SCALE_LB = 1e-05             # params_lb / scale_lb
ALPHA = 1e-06                # `shape` passed to general_adaptive_loss

_B = abs(ALPHA - 2.0)        # |alpha - 2|  (~2)
_INV_B = 1.0 / _B

# --- tiling -------------------------------------------------------------------
_TARGET_BLOCK_ELEMS = 1 << 20            # 1M f32 elems = 4 MiB per block/buffer
_LANE_CANDIDATES = (1024, 512, 256, 128) # lane-dense widths (multiples of 128)
_VMEM_LIMIT_BYTES = 32 * 1024 * 1024     # explicit: covers v5e's 16 MiB default


def _cauchy_nll_kernel(x_ref, scale_ref, o_ref):
    x = x_ref[...]
    s_raw = scale_ref[...] + SCALE_INIT

    # Numerically stable softplus == F.softplus (matches the threshold-20 linear
    # region to f32 precision):  max(s, 0) + log1p(exp(-|s|)).
    sp = jnp.maximum(s_raw, 0.0) + jnp.log1p(jnp.exp(-jnp.abs(s_raw)))
    c = sp + SCALE_LB

    # z = (x / c)^2; exact division for parity with torch (kernel is HBM-bound,
    # the extra EUP/VPU work hides under the DMA).
    xc = x / c
    z = xc * xc

    # Barron general adaptive loss, alpha = 1e-6:
    #   (b/a) * ((z/b + 1)^(a/2) - 1) == (b/a) * expm1((a/2) * log1p(z/b))
    # With (a/2)*L <= ~1e-5, expand expm1 in a 2-term series:
    #   == (b/2) * L * (1 + (a/4) * L) + O((a*L)^2)      (truncation ~1e-10 rel)
    # This avoids the tiny-argument expm1 whose rounding error is amplified by
    # b/a ~ 2e6, and saves one EUP transcendental per element.
    L = jnp.log1p(z * _INV_B)
    o_ref[...] = (0.5 * _B) * L * (1.0 + (0.25 * ALPHA) * L)


def _pick_lanes(total):
    for lanes in _LANE_CANDIDATES:
        if total % lanes == 0:
            return lanes
    return None


def _pick_block_rows(rows, max_block_rows):
    """Sublane-aligned block height (multiple of 8, or the full row count),
    capped by the ~4 MiB VMEM budget, aiming for >= ~16 grid steps on large
    slabs so v7x's two TensorCores both get work and the pipeline has depth."""
    if rows <= 16:
        return rows
    target = (pl.cdiv(rows, 16) + 7) // 8 * 8
    br = min(max_block_rows, max(8, target))
    if br >= rows:
        return rows
    return br


def _run_slab(x2d, s2d, br, lanes):
    rows = x2d.shape[0]
    grid = (pl.cdiv(rows, br),)
    n_elems = rows * lanes
    cost = pl.CostEstimate(
        flops=12 * n_elems,
        transcendentals=4 * n_elems,        # exp, 2x log1p, 1/c
        bytes_accessed=3 * n_elems * 4,     # 2 reads + 1 write, f32
    )
    return pl.pallas_call(
        _cauchy_nll_kernel,
        out_shape=jax.ShapeDtypeStruct((rows, lanes), jnp.float32),
        grid=grid,
        in_specs=[
            pl.BlockSpec((br, lanes), lambda i: (i, 0)),
            pl.BlockSpec((br, lanes), lambda i: (i, 0)),
        ],
        out_specs=pl.BlockSpec((br, lanes), lambda i: (i, 0)),
        compiler_params=pltpu.CompilerParams(
            dimension_semantics=("parallel",),
            vmem_limit_bytes=_VMEM_LIMIT_BYTES,
        ),
        cost_estimate=cost,
    )(x2d, s2d)


def cauchy_nll(x, scale):
    """x: (N, 1, H, W) float32; scale: reshapeable to (N, 1, H, W).

    Returns the elementwise adaptive (Cauchy) loss, shape (N, 1, H, W),
    matching CauchyNLL.forward semantics.
    """
    x = jnp.asarray(x, jnp.float32)
    n, c, h, w = x.shape
    assert c == 1
    scale = jnp.asarray(scale, jnp.float32).reshape(n, c, h, w)

    total = n * c * h * w
    lanes = _pick_lanes(total)

    if lanes is not None:
        # Fast path: contiguous reshape to a lane-dense (rows, lanes) slab is
        # layout plumbing (no pad / trim HBM round-trips).  A partial last row
        # block (rows % br != 0) is handled by Pallas' masked boundary stores.
        rows = total // lanes
        br = _pick_block_rows(rows, _TARGET_BLOCK_ELEMS // lanes)
        out2d = _run_slab(x.reshape(rows, lanes), scale.reshape(rows, lanes),
                          br, lanes)
        return out2d.reshape(n, c, h, w)

    # Ragged fallback (total not a multiple of 128): pad the flat stream to the
    # next 128-lane boundary.  Pad values (x=0, scale=0) give finite outputs.
    # TODO(synk): handle the <128-element ragged tail with an in-kernel masked
    # store instead of these extra pad/trim HBM passes.
    lanes = 128
    rows = pl.cdiv(total, lanes)
    padded = rows * lanes
    br = _pick_block_rows(rows, _TARGET_BLOCK_ELEMS // lanes)
    x2d = jnp.pad(x.reshape(-1), (0, padded - total)).reshape(rows, lanes)
    s2d = jnp.pad(scale.reshape(-1), (0, padded - total)).reshape(rows, lanes)
    out2d = _run_slab(x2d, s2d, br, lanes)
    return out2d.reshape(-1)[:total].reshape(n, c, h, w)

    # TODO(synk): if the downstream consumer reduces this loss (mean/sum NLL),
    # fuse the reduction into the kernel epilogue and emit a per-block partial
    # sum instead of the full map (drops the whole output write stream).


def _reference(x, scale):
    s_raw = scale + SCALE_INIT
    sp = jnp.maximum(s_raw, 0.0) + jnp.log1p(jnp.exp(-jnp.abs(s_raw)))
    c = sp + SCALE_LB
    z = (x / c) ** 2
    L = jnp.log1p(z * _INV_B)
    return (0.5 * _B) * L * (1.0 + (0.25 * ALPHA) * L)


if __name__ == "__main__":
    key = jax.random.PRNGKey(0)
    fn = jax.jit(cauchy_nll)

    # CauchyNLL.forward asserts channels == 1.
    for (N, C, H, W) in [(2, 1, 32, 32),   # 2048 elems -> (2, 1024) slab, no pad
                         (2, 1, 16, 16)]:  # 512 elems  -> (1, 512) slab, no pad
        key, kx, ks = jax.random.split(key, 3)
        x = jax.random.normal(kx, (N, C, H, W), dtype=jnp.float32)
        scale = jax.random.normal(ks, (N, C, H, W), dtype=jnp.float32)

        out = fn(x, scale)
        jax.block_until_ready(out)

        assert out.shape == (N, C, H, W)
        ref = _reference(x, scale)
        max_err = float(jnp.max(jnp.abs(out - ref)))
        assert jnp.allclose(out, ref, rtol=1e-3, atol=1e-4), max_err
        assert bool(jnp.all(jnp.isfinite(out)))

    print("KERNEL_OK")
</pallas_src>

<mosaic_0001>
module attributes {stable_mosaic.version = 11 : i64} {
  func.func @_cauchy_nll_kernel(%arg0: i32, %arg1: memref<2x1024xf32, #tpu.memory_space<vmem>>, %arg2: memref<2x1024xf32, #tpu.memory_space<vmem>>, %arg3: memref<2x1024xf32, #tpu.memory_space<vmem>>) attributes {dimension_semantics = [#tpu.dimension_semantics<parallel>], iteration_bounds = array<i64: 1>, scalar_prefetch = 0 : i64, scratch_operands = 0 : i64, tpu.core_type = #tpu.core_type<tc>, window_params = [{transform_indices = @transform_0, window_bounds = array<i64: 2, 1024>}, {transform_indices = @transform_1, window_bounds = array<i64: 2, 1024>}, {transform_indices = @transform_2, window_bounds = array<i64: 2, 1024>}]} {
    %c0 = arith.constant 0 : index
    %c0_0 = arith.constant 0 : index
    %0 = vector.load %arg1[%c0, %c0_0] : memref<2x1024xf32, #tpu.memory_space<vmem>>, vector<2x1024xf32>
    %c0_1 = arith.constant 0 : index
    %c0_2 = arith.constant 0 : index
    %1 = vector.load %arg2[%c0_1, %c0_2] : memref<2x1024xf32, #tpu.memory_space<vmem>>, vector<2x1024xf32>
    %cst = arith.constant 5.413000e-01 : f32
    %2 = vector.broadcast %cst : f32 to vector<2x1024xf32>
    %3 = arith.addf %1, %2 : vector<2x1024xf32>
    %cst_3 = arith.constant 0.000000e+00 : f32
    %4 = vector.broadcast %cst_3 : f32 to vector<2x1024xf32>
    %5 = arith.maximumf %3, %4 : vector<2x1024xf32>
    %6 = math.absf %3 : vector<2x1024xf32>
    %cst_4 = arith.constant 0.000000e+00 : f32
    %7 = vector.broadcast %cst_4 : f32 to vector<2x1024xf32>
    %8 = arith.subf %7, %6 : vector<2x1024xf32>
    %9 = math.exp %8 : vector<2x1024xf32>
    %10 = math.log1p %9 : vector<2x1024xf32>
    %11 = arith.addf %5, %10 : vector<2x1024xf32>
    %cst_5 = arith.constant 9.99999974E-6 : f32
    %12 = vector.broadcast %cst_5 : f32 to vector<2x1024xf32>
    %13 = arith.addf %11, %12 : vector<2x1024xf32>
    %14 = arith.divf %0, %13 : vector<2x1024xf32>
    %15 = arith.mulf %14, %14 : vector<2x1024xf32>
    %cst_6 = arith.constant 0.500000238 : f32
    %16 = vector.broadcast %cst_6 : f32 to vector<2x1024xf32>
    %17 = arith.mulf %15, %16 : vector<2x1024xf32>
    %18 = math.log1p %17 : vector<2x1024xf32>
    %cst_7 = arith.constant 0.999999523 : f32
    %19 = vector.broadcast %cst_7 : f32 to vector<2x1024xf32>
    %20 = arith.mulf %19, %18 : vector<2x1024xf32>
    %cst_8 = arith.constant 2.500000e-07 : f32
    %21 = vector.broadcast %cst_8 : f32 to vector<2x1024xf32>
    %22 = arith.mulf %21, %18 : vector<2x1024xf32>
    %cst_9 = arith.constant 1.000000e+00 : f32
    %23 = vector.broadcast %cst_9 : f32 to vector<2x1024xf32>
    %24 = arith.addf %23, %22 : vector<2x1024xf32>
    %25 = arith.mulf %20, %24 : vector<2x1024xf32>
    %c0_10 = arith.constant 0 : index
    %c0_11 = arith.constant 0 : index
    %26 = vector.load %arg3[%c0_10, %c0_11] : memref<2x1024xf32, #tpu.memory_space<vmem>>, vector<2x1024xf32>
    tpu.vector_store %arg3[%c0_10, %c0_11], %25 {strides = array<i32>} : memref<2x1024xf32, #tpu.memory_space<vmem>>, vector<2x1024xf32>,
    return
  }
  func.func @transform_0(%arg0: i32) -> (i32, i32) {
    %c0_i32 = arith.constant 0 : i32
    %c0_i32_0 = arith.constant 0 : i32
    return %arg0, %c0_i32 : i32, i32
  }
  func.func @transform_1(%arg0: i32) -> (i32, i32) {
    %c0_i32 = arith.constant 0 : i32
    %c0_i32_0 = arith.constant 0 : i32
    return %arg0, %c0_i32 : i32, i32
  }
  func.func @transform_2(%arg0: i32) -> (i32, i32) {
    %c0_i32 = arith.constant 0 : i32
    %c0_i32_0 = arith.constant 0 : i32
    return %arg0, %c0_i32 : i32, i32
  }
}

</mosaic_0001>

<llo_original>
// kernel: cauchy_nll.1
$region0: #{cauchy_nll.1}
  #allocation0 [shape = 'u32[]', space=smem, size = 0x4, offset = 0x4, fixed_abs, tag = 'smem constant byte address 0x4 - core index']
  #allocation1 [shape = 'u32[144,128]{1,0:T(1,128)}', space=vmem, size = 0x12000, scoped, tag = 'internal scratch']
  %s0 = inlined_call_operand.vmem [shape: f32[2,1024], index: 0, kind: input, shape index: {}]
  %s1 = inlined_call_operand.vmem [shape: f32[2,1024], index: 1, kind: input, shape index: {}]
  %s2 = inlined_call_operand.vmem [shape: f32[2,1024], index: 2, kind: output, shape index: {}]
  %s3 = sld [smem:[#allocation0]]
  $region18: #{cauchy_nll.1} parent=0
    _
  %s5 = ssub.s32 1, %s3
  %s6 = scalar_select 0, %s5, %s3
  // Predicated region
  $region2: #{cauchy_nll.1} parent=0 // pred_check
    _
  $region3: #{cauchy_nll.1} parent=0 // pred_check_branch
    %8 = sbr.rel (0) target = $region5
  $region4: #{cauchy_nll.1} parent=0 // pred_region
    _
  $region5: #{cauchy_nll.1} parent=0 // pred_fallthru
    _
  // Predicated region
  $region6: #{cauchy_nll.1} parent=0 // pred_check
    _
  $region7: #{cauchy_nll.1} parent=0 // pred_check_branch
    %10 = sbr.rel (0) target = $region9
  $region8: #{cauchy_nll.1} parent=0 // pred_region
    _
  $region9: #{cauchy_nll.1} parent=0 // pred_fallthru
    _
  %v11 = vld [vmem:[%s0] sm:$0xff]
  %v12 = vld [vmem:[%s0 + $0x8] sm:$0xff]
  %v13 = vld [vmem:[%s1] sm:$0xff]
  %v14 = vld [vmem:[%s1 + $0x8] sm:$0xff]
  %v15 = vadd.f32 %v13, 0.5413
  %v16 = vadd.f32 %v14, 0.5413
  %v17 = vmax.f32 %v15, 0.0
  %v18 = vmax.f32 %v16, 0.0
  %v19 = vand.u32 2147483647, %v15
  %v20 = vand.u32 2147483647, %v16
  %v21 = vsub.f32 0.0, %v19
  %v22 = vsub.f32 0.0, %v20
  %v23 = vmul.f32 %v21, 1.442695
  %v24 = vpow.pop %v23
  %v25 = vmul.f32 %v22, 1.442695
  %v26 = vpow.pop %v25
  %v27 = vadd.f32 %v24, 1.0
  %v28 = vlog2.pop %v27
  %v29 = vmul.f32 %v28, 0.6931472
  %v30 = vmul.f32 -0.5, %v24
  %v31 = vadd.f32 %v30, 1.0
  %v32 = vmul.f32 %v31, %v24
  %v33 = vand.u32 2147483647, %v24
  %vm34 = vcmp.lt.f32.partialorder %v33, 0.0004427343
  %v35 = vsel %vm34, %v32, %v29
  %v36 = vadd.f32 %v26, 1.0
  %v37 = vlog2.pop %v36
  %v38 = vmul.f32 %v37, 0.6931472
  %v39 = vmul.f32 -0.5, %v26
  %v40 = vadd.f32 %v39, 1.0
  %v41 = vmul.f32 %v40, %v26
  %v42 = vand.u32 2147483647, %v26
  %vm43 = vcmp.lt.f32.partialorder %v42, 0.0004427343
  %v44 = vsel %vm43, %v41, %v38
  %v45 = vadd.f32 %v17, %v35
  %v46 = vadd.f32 %v18, %v44
  %v47 = vadd.f32 %v45, 1e-05
  %v48 = vadd.f32 %v46, 1e-05
  %v49 = vrcp.pop %v47
  %v50 = vmul.f32 %v11, %v49
  %v51 = vrcp.pop %v48
  %v52 = vmul.f32 %v12, %v51
  %v53 = vmul.f32 %v50, %v50
  %v54 = vmul.f32 %v52, %v52
  %v55 = vmul.f32 %v53, 0.50000024
  %v56 = vmul.f32 %v54, 0.50000024
  %v57 = vadd.f32 %v55, 1.0
  %v58 = vlog2.pop %v57
  %v59 = vmul.f32 %v58, 0.6931472
  %v60 = vmul.f32 -0.5, %v55
  %v61 = vadd.f32 %v60, 1.0
  %v62 = vmul.f32 %v61, %v55
  %v63 = vand.u32 2147483647, %v55
  %vm64 = vcmp.lt.f32.partialorder %v63, 0.0004427343
  %v65 = vsel %vm64, %v62, %v59
  %v66 = vadd.f32 %v56, 1.0
  %v67 = vlog2.pop %v66
  %v68 = vmul.f32 %v67, 0.6931472
  %v69 = vmul.f32 -0.5, %v56
  %v70 = vadd.f32 %v69, 1.0
  %v71 = vmul.f32 %v70, %v56
  %v72 = vand.u32 2147483647, %v56
  %vm73 = vcmp.lt.f32.partialorder %v72, 0.0004427343
  %v74 = vsel %vm73, %v71, %v68
  %v75 = vmul.f32 %v65, 0.9999995
  %v76 = vmul.f32 %v74, 0.9999995
  %v77 = vmul.f32 %v65, 2.5e-07
  %v78 = vmul.f32 %v74, 2.5e-07
  %v79 = vadd.f32 %v77, 1.0
  %v80 = vadd.f32 %v78, 1.0
  %v81 = vmul.f32 %v75, %v79
  %v82 = vmul.f32 %v76, %v80
  %83 = vst [vmem:[%s2] sm:$0xff] %v81
  %84 = vst [vmem:[%s2 + $0x8] sm:$0xff] %v82
  // Predicated region
  $region10: #{cauchy_nll.1} parent=0 // pred_check
    _
  $region11: #{cauchy_nll.1} parent=0 // pred_check_branch
    %86 = sbr.rel (0) target = $region13
  $region12: #{cauchy_nll.1} parent=0 // pred_region
    _
  $region13: #{cauchy_nll.1} parent=0 // pred_fallthru
    _
  // Predicated region
  $region14: #{cauchy_nll.1} parent=0 // pred_check
    _
  $region15: #{cauchy_nll.1} parent=0 // pred_check_branch
    %88 = sbr.rel (0) target = $region17
  $region16: #{cauchy_nll.1} parent=0 // pred_region
    _
  $region17: #{cauchy_nll.1} parent=0 // pred_fallthru
    _

</llo_original>
